<compile_context>
chip_gen: v7x
topology: tpu7x:2x2x1
jax: 0.10.0
libtpu: 0.0.40
codegen_flags: <defaults>
</compile_context>

<pallas_src>
import functools
import math

import jax
import jax.numpy as jnp
from jax.experimental import pallas as pl
from jax.experimental.pallas import tpu as pltpu


_VMEM_BUDGET = 10 * 1024 * 1024  # bytes for double-buffered blocks (v5e-safe)


# --------------------------------------------------------------------------- #
# Kernels                                                                      #
# --------------------------------------------------------------------------- #
def _row_matmul_kernel(x_ref, w_ref, o_ref):
    """(tm, a_in) @ (a_in, tn) -> (tm, tn); resamples the LAST spatial axis."""
    o_ref[...] = jnp.dot(
        x_ref[...], w_ref[...], preferred_element_type=jnp.float32
    ).astype(o_ref.dtype)


def _slab_matmul_kernel(w_ref, x_ref, o_ref, *, tg):
    """Resamples a MIDDLE spatial axis: per-slab (a_out, a_in) @ (a_in, tr).

    w_ref: (a_out, a_in)   transposed per-axis weights (shared by all slabs)
    x_ref: (tg, a_in, tr)  tg slabs packed into one grid step
    o_ref: (tg, a_out, tr)
    """
    w = w_ref[...]
    for g in range(tg):  # static unroll; tg is small (<= 8)
        o_ref[g] = jnp.dot(
            w, x_ref[g], preferred_element_type=jnp.float32
        ).astype(o_ref.dtype)


# --------------------------------------------------------------------------- #
# Host-side per-axis resampling weights                                        #
# --------------------------------------------------------------------------- #
def _axis_weight_matrix(in_size: int, out_size: int, mode: str) -> jnp.ndarray:
    """(in_size, out_size) resampling weights for one spatial axis, f32."""
    o = jnp.arange(out_size)
    i = jnp.arange(in_size)
    if mode == "nearest":
        # PyTorch 'nearest': src = floor(dst * in / out)  (exact int math)
        src = jnp.clip((o * in_size) // out_size, 0, in_size - 1)
        return (i[:, None] == src[None, :]).astype(jnp.float32)
    if mode == "nearest-exact":
        src = jnp.clip(((2 * o + 1) * in_size) // (2 * out_size), 0, in_size - 1)
        return (i[:, None] == src[None, :]).astype(jnp.float32)
    if mode in ("linear", "bilinear", "trilinear"):
        # align_corners=False (PyTorch default), antialias=False.
        scale = in_size / out_size
        src = (o.astype(jnp.float32) + 0.5) * scale - 0.5
        src = jnp.clip(src, 0.0, float(in_size - 1))
        lo = jnp.floor(src).astype(jnp.int32)
        hi = jnp.minimum(lo + 1, in_size - 1)
        w_hi = src - lo.astype(jnp.float32)
        w_lo = 1.0 - w_hi
        w = (w_lo[None, :] * (i[:, None] == lo[None, :]).astype(jnp.float32)
             + w_hi[None, :] * (i[:, None] == hi[None, :]).astype(jnp.float32))
        return w
    # TODO(synk): bicubic / area modes are not implemented.
    raise NotImplementedError(f"Interpolate: unsupported mode {mode!r}")


# --------------------------------------------------------------------------- #
# Tile selection (VMEM budget across v5e / v6e / v7x)                          #
# --------------------------------------------------------------------------- #
def _fit_row_tiles(rows: int, a_in: int, a_out: int, itemsize: int):
    tm = rows if rows <= 2048 else 2048          # full dim or multiple of 8
    tn = a_out if a_out <= 2048 else 2048        # full dim or multiple of 128

    def need(tm_, tn_):
        return (tm_ * a_in + a_in * tn_ + tm_ * tn_) * itemsize * 2

    while need(tm, tn) > _VMEM_BUDGET:
        if tm > 8:
            tm = max(8, ((tm // 2) // 8) * 8)
        elif tn > 128:
            tn = max(128, ((tn // 2) // 128) * 128)
        else:
            break
    return tm, tn


def _fit_slab_tiles(g: int, a_in: int, a_out: int, r: int, itemsize: int):
    tg = min(g, 8)                               # slabs per grid step
    tr = r if r <= 2048 else 2048                # full dim or multiple of 128

    def need(tg_, tr_):
        return (tg_ * a_in * tr_ + a_in * a_out + tg_ * a_out * tr_) * itemsize * 2

    while need(tg, tr) > _VMEM_BUDGET:
        if tg > 1:
            tg = max(1, tg // 2)
        elif tr > 128:
            tr = max(128, ((tr // 2) // 128) * 128)
        else:
            break
    return tg, tr


# --------------------------------------------------------------------------- #
# One resampling pass per spatial axis                                         #
# --------------------------------------------------------------------------- #
def _resample_last_axis(x2d, w, out_dtype):
    """x2d: (rows, a_in), w: (a_in, a_out) -> (rows, a_out)."""
    rows, a_in = int(x2d.shape[0]), int(x2d.shape[1])
    a_out = int(w.shape[1])
    itemsize = jnp.dtype(x2d.dtype).itemsize
    tm, tn = _fit_row_tiles(rows, a_in, a_out, itemsize)
    grid = (pl.cdiv(rows, tm), pl.cdiv(a_out, tn))
    return pl.pallas_call(
        _row_matmul_kernel,
        out_shape=jax.ShapeDtypeStruct((rows, a_out), out_dtype),
        grid_spec=pltpu.PrefetchScalarGridSpec(
            num_scalar_prefetch=0,
            grid=grid,
            in_specs=[
                pl.BlockSpec((tm, a_in), lambda i, j: (i, 0)),
                pl.BlockSpec((a_in, tn), lambda i, j: (0, j)),
            ],
            out_specs=pl.BlockSpec((tm, tn), lambda i, j: (i, j)),
        ),
        compiler_params=pltpu.CompilerParams(
            dimension_semantics=("parallel", "parallel"),
        ),
    )(x2d, w)


def _resample_mid_axis(x3d, w_t, out_dtype):
    """x3d: (G, a_in, R), w_t: (a_out, a_in) -> (G, a_out, R)."""
    g, a_in, r = (int(d) for d in x3d.shape)
    a_out = int(w_t.shape[0])
    itemsize = jnp.dtype(x3d.dtype).itemsize
    tg, tr = _fit_slab_tiles(g, a_in, a_out, r, itemsize)
    grid = (pl.cdiv(g, tg), pl.cdiv(r, tr))
    kernel = functools.partial(_slab_matmul_kernel, tg=tg)
    return pl.pallas_call(
        kernel,
        out_shape=jax.ShapeDtypeStruct((g, a_out, r), out_dtype),
        grid_spec=pltpu.PrefetchScalarGridSpec(
            num_scalar_prefetch=0,
            grid=grid,
            in_specs=[
                pl.BlockSpec((a_out, a_in), lambda i, j: (0, 0)),
                pl.BlockSpec((tg, a_in, tr), lambda i, j: (i, 0, j)),
            ],
            out_specs=pl.BlockSpec((tg, a_out, tr), lambda i, j: (i, 0, j)),
        ),
        compiler_params=pltpu.CompilerParams(
            dimension_semantics=("parallel", "parallel"),
        ),
    )(w_t, x3d)


# --------------------------------------------------------------------------- #
# Public wrapper                                                               #
# --------------------------------------------------------------------------- #
def interpolate(x, size, mode: str = "nearest", antialias: bool = False):
    """JAX/Pallas equivalent of F.interpolate(x, size=size, mode=mode)."""
    if antialias:
        # TODO(synk): antialiased resampling kernels are not implemented.
        raise NotImplementedError("antialias=True is not supported")
    assert x.ndim >= 3, "expected (B, C, *spatial) input"

    in_spatial = tuple(int(d) for d in x.shape[2:])
    n_sp = len(in_spatial)
    if isinstance(size, int):
        out_spatial = (int(size),) * n_sp
    else:
        out_spatial = tuple(int(s) for s in size)
    assert len(out_spatial) == n_sp, "size rank must match spatial rank"

    if out_spatial == in_spatial:
        return x

    b, c = int(x.shape[0]), int(x.shape[1])
    m = b * c

    # Native dtype end-to-end for bf16/f32; otherwise compute in f32.
    if x.dtype in (jnp.dtype(jnp.bfloat16), jnp.dtype(jnp.float32)):
        compute_dtype = x.dtype
    else:
        compute_dtype = jnp.dtype(jnp.float32)

    cur = list(in_spatial)
    y = x.astype(compute_dtype)
    n_passes = sum(int(i != o) for i, o in zip(in_spatial, out_spatial))
    done = 0
    # Innermost axis first; every pass resamples the axis in place, so only
    # free reshapes are needed between passes (no transposes).
    for ax in reversed(range(n_sp)):
        n_in, n_out = cur[ax], out_spatial[ax]
        if n_in == n_out:
            continue  # identity axis: skip the pass entirely
        done += 1
        out_dtype = x.dtype if done == n_passes else compute_dtype
        w = _axis_weight_matrix(n_in, n_out, mode).astype(compute_dtype)
        lead = m * math.prod(cur[:ax])
        trail = math.prod(cur[ax + 1:])
        if ax == n_sp - 1:
            y2 = _resample_last_axis(y.reshape(lead, n_in), w, out_dtype)
        else:
            y2 = _resample_mid_axis(y.reshape(lead, n_in, trail), w.T, out_dtype)
        cur[ax] = n_out
        y = y2.reshape((b, c) + tuple(cur))
    return y


class Interpolate:
    """Mirror of the PyTorch nn.Module wrapper around F.interpolate."""

    def __init__(self, size, mode: str = "nearest", antialias: bool = False):
        self.size = size
        self.mode = mode
        self.antialias = antialias

    def __call__(self, inputs):
        return interpolate(inputs, size=self.size, mode=self.mode,
                           antialias=self.antialias)


# --------------------------------------------------------------------------- #
# Self-test                                                                    #
# --------------------------------------------------------------------------- #
if __name__ == "__main__":
    key = jax.random.PRNGKey(0)
    B, C, H, W = 2, 4, 16, 16
    x = jax.random.normal(key, (B, C, H, W), dtype=jnp.float32)

    # 1) nearest 2x upsample (module default mode)
    out = jax.block_until_ready(Interpolate(size=(32, 32), mode="nearest")(x))
    assert out.shape == (B, C, 32, 32)
    sh = (jnp.arange(32) * H) // 32
    sw = (jnp.arange(32) * W) // 32
    ref = x[:, :, sh, :][:, :, :, sw]
    assert bool(jnp.allclose(out, ref)), "nearest 2x upsample mismatch"

    # 2) nearest asymmetric resize (downsample H, upsample W, odd lane width)
    out2 = jax.block_until_ready(interpolate(x, size=(8, 24), mode="nearest"))
    assert out2.shape == (B, C, 8, 24)
    sh2 = (jnp.arange(8) * H) // 8
    sw2 = (jnp.arange(24) * W) // 24
    ref2 = x[:, :, sh2, :][:, :, :, sw2]
    assert bool(jnp.allclose(out2, ref2)), "nearest asymmetric resize mismatch"

    # 3) bilinear vs an independent gather+lerp reference
    #    (PyTorch align_corners=False half-pixel convention)
    def _lin_idx_w(n_in, n_out):
        src = jnp.clip((jnp.arange(n_out) + 0.5) * n_in / n_out - 0.5,
                       0.0, n_in - 1.0)
        lo = jnp.floor(src).astype(jnp.int32)
        hi = jnp.minimum(lo + 1, n_in - 1)
        return lo, hi, (src - lo).astype(jnp.float32)

    hl, hh, hwt = _lin_idx_w(H, 32)
    wl, wh, wwt = _lin_idx_w(W, 32)
    xh = (x[:, :, hl, :] * (1.0 - hwt)[None, None, :, None]
          + x[:, :, hh, :] * hwt[None, None, :, None])
    ref3 = xh[:, :, :, wl] * (1.0 - wwt) + xh[:, :, :, wh] * wwt
    out3 = jax.block_until_ready(interpolate(x, size=(32, 32), mode="bilinear"))
    assert out3.shape == (B, C, 32, 32)
    assert bool(jnp.allclose(out3, ref3, atol=1e-5)), "bilinear mismatch"

    # 4) bilinear partition of unity: constant in -> constant out
    ones = jnp.ones((B, C, H, W), dtype=jnp.float32)
    out4 = jax.block_until_ready(interpolate(ones, size=(32, 32), mode="bilinear"))
    assert bool(jnp.allclose(out4, 1.0, atol=1e-5)), "bilinear normalization"

    # 5) 3-D nearest (exercises the three-pass D/H/W path)
    x3 = jax.random.normal(jax.random.PRNGKey(1), (2, 3, 4, 8, 8),
                           dtype=jnp.float32)
    out5 = jax.block_until_ready(interpolate(x3, size=(8, 16, 16), mode="nearest"))
    assert out5.shape == (2, 3, 8, 16, 16)
    sd = (jnp.arange(8) * 4) // 8
    s3h = (jnp.arange(16) * 8) // 16
    s3w = (jnp.arange(16) * 8) // 16
    ref5 = x3[:, :, sd, :, :][:, :, :, s3h, :][:, :, :, :, s3w]
    assert bool(jnp.allclose(out5, ref5)), "3-D nearest mismatch"

    print("KERNEL_OK")
</pallas_src>

<mosaic_0001>
module attributes {stable_mosaic.version = 11 : i64} {
  func.func @_row_matmul_kernel(%arg0: i32, %arg1: i32, %arg2: memref<128x16xf32, #tpu.memory_space<vmem>>, %arg3: memref<16x32xf32, #tpu.memory_space<vmem>>, %arg4: memref<128x32xf32, #tpu.memory_space<vmem>>) attributes {dimension_semantics = [#tpu.dimension_semantics<parallel>, #tpu.dimension_semantics<parallel>], iteration_bounds = array<i64: 1, 1>, scalar_prefetch = 0 : i64, scratch_operands = 0 : i64, tpu.core_type = #tpu.core_type<tc>, window_params = [{transform_indices = @transform_0, window_bounds = array<i64: 128, 16>}, {transform_indices = @transform_1, window_bounds = array<i64: 16, 32>}, {transform_indices = @transform_2, window_bounds = array<i64: 128, 32>}]} {
    %c0 = arith.constant 0 : index
    %c0_0 = arith.constant 0 : index
    %0 = vector.load %arg2[%c0, %c0_0] : memref<128x16xf32, #tpu.memory_space<vmem>>, vector<128x16xf32>
    %c0_1 = arith.constant 0 : index
    %c0_2 = arith.constant 0 : index
    %1 = vector.load %arg3[%c0_1, %c0_2] : memref<16x32xf32, #tpu.memory_space<vmem>>, vector<16x32xf32>
    %cst = arith.constant dense<0.000000e+00> : vector<128x32xf32>
    %2 = tpu.matmul %0, %1, %cst {dimension_numbers = #tpu.dot_dimension_numbers<[1], [0], [0], [1], [0, 0, 1, 1], [], []>} : vector<128x16xf32>, vector<16x32xf32>, vector<128x32xf32> -> vector<128x32xf32>
    %c0_3 = arith.constant 0 : index
    %c0_4 = arith.constant 0 : index
    %3 = vector.load %arg4[%c0_3, %c0_4] : memref<128x32xf32, #tpu.memory_space<vmem>>, vector<128x32xf32>
    tpu.vector_store %arg4[%c0_3, %c0_4], %2 {strides = array<i32>} : memref<128x32xf32, #tpu.memory_space<vmem>>, vector<128x32xf32>,
    return
  }
  func.func @transform_0(%arg0: i32, %arg1: i32) -> (i32, i32) {
    %c0_i32 = arith.constant 0 : i32
    %c0_i32_0 = arith.constant 0 : i32
    return %arg0, %c0_i32 : i32, i32
  }
  func.func @transform_1(%arg0: i32, %arg1: i32) -> (i32, i32) {
    %c0_i32 = arith.constant 0 : i32
    %c0_i32_0 = arith.constant 0 : i32
    return %c0_i32, %arg1 : i32, i32
  }
  func.func @transform_2(%arg0: i32, %arg1: i32) -> (i32, i32) {
    %c0_i32 = arith.constant 0 : i32
    return %arg0, %arg1 : i32, i32
  }
}

</mosaic_0001>

<llo_original>
// kernel: tpu_custom_call.1
$region0: #{tpu_custom_call.1}
  #allocation0 [shape = 'u32[]', space=smem, size = 0x4, offset = 0x4, fixed_abs, tag = 'smem constant byte address 0x4 - core index']
  #allocation1 [shape = 'u32[144,128]{1,0:T(1,128)}', space=vmem, size = 0x12000, scoped, tag = 'internal scratch']
  %s0 = inlined_call_operand.vmem [shape: f32[128,16], index: 0, kind: input, shape index: {}]
  %s1 = inlined_call_operand.vmem [shape: f32[16,32], index: 1, kind: input, shape index: {}]
  %s2 = inlined_call_operand.vmem [shape: f32[128,32], index: 2, kind: output, shape index: {}]
  %s3 = sld [smem:[#allocation0]]
  $region18: #{tpu_custom_call.1} parent=0
    _
  %s5 = ssub.s32 1, %s3
  %s6 = scalar_select 0, %s5, %s3
  // Predicated region
  $region2: #{tpu_custom_call.1} parent=0 // pred_check
    _
  $region3: #{tpu_custom_call.1} parent=0 // pred_check_branch
    %8 = sbr.rel (0) target = $region5
  $region4: #{tpu_custom_call.1} parent=0 // pred_region
    _
  $region5: #{tpu_custom_call.1} parent=0 // pred_fallthru
    _
  // Predicated region
  $region6: #{tpu_custom_call.1} parent=0 // pred_check
    _
  $region7: #{tpu_custom_call.1} parent=0 // pred_check_branch
    %10 = sbr.rel (0) target = $region9
  $region8: #{tpu_custom_call.1} parent=0 // pred_region
    _
  $region9: #{tpu_custom_call.1} parent=0 // pred_fallthru
    _
  %v11 = vld [vmem:[%s0] sm:$0xff]
  %v12 = vld [vmem:[%s0 + $0x8] sm:$0xff]
  %v13 = vld [vmem:[%s0 + $0x10] sm:$0xff]
  %v14 = vld [vmem:[%s0 + $0x18] sm:$0xff]
  %v15 = vld [vmem:[%s0 + $0x20] sm:$0xff]
  %v16 = vld [vmem:[%s0 + $0x28] sm:$0xff]
  %v17 = vld [vmem:[%s0 + $0x30] sm:$0xff]
  %v18 = vld [vmem:[%s0 + $0x38] sm:$0xff]
  %v19 = vld [vmem:[%s0 + $0x40] sm:$0xff]
  %v20 = vld [vmem:[%s0 + $0x48] sm:$0xff]
  %v21 = vld [vmem:[%s0 + $0x50] sm:$0xff]
  %v22 = vld [vmem:[%s0 + $0x58] sm:$0xff]
  %v23 = vld [vmem:[%s0 + $0x60] sm:$0xff]
  %v24 = vld [vmem:[%s0 + $0x68] sm:$0xff]
  %v25 = vld [vmem:[%s0 + $0x70] sm:$0xff]
  %v26 = vld [vmem:[%s0 + $0x78] sm:$0xff]
  %v27 = vld [vmem:[%s1] sm:$0xff]
  %v28 = vld [vmem:[%s1 + $0x8] sm:$0xff]
  %vm29 = vcmask 130048
  %v31 = vsel %vm29, %v11, 0
  %v34 = vsel %vm29, %v12, 0
  %v37 = vsel %vm29, %v13, 0
  %v40 = vsel %vm29, %v14, 0
  %v43 = vsel %vm29, %v15, 0
  %v46 = vsel %vm29, %v16, 0
  %v49 = vsel %vm29, %v17, 0
  %v52 = vsel %vm29, %v18, 0
  %v55 = vsel %vm29, %v19, 0
  %v58 = vsel %vm29, %v20, 0
  %v61 = vsel %vm29, %v21, 0
  %v64 = vsel %vm29, %v22, 0
  %v67 = vsel %vm29, %v23, 0
  %v70 = vsel %vm29, %v24, 0
  %v73 = vsel %vm29, %v25, 0
  %v76 = vsel %vm29, %v26, 0
  %78 = vmatprep.subr.mxu0 0.0
  %79 = vmatpush1.msra.mxu0 %v27
  %80 = vmatprep.subr.mxu0 0.0
  %81 = vmatpush1.msra.mxu0 %v28
  %82 = vmatprep.subr.mxu0 0.0
  %83 = vmatpush1.msra.mxu0 0.0
  %84 = vmatprep.subr.mxu0 0.0
  %85 = vmatpush1.msra.mxu0 0.0
  %86 = vmatprep.subr.mxu0 0.0
  %87 = vmatpush1.msra.mxu0 0.0
  %88 = vmatprep.subr.mxu0 0.0
  %89 = vmatpush1.msra.mxu0 0.0
  %90 = vmatprep.subr.mxu0 0.0
  %91 = vmatpush1.msra.mxu0 0.0
  %92 = vmatprep.subr.mxu0 0.0
  %93 = vmatpush1.msra.mxu0 0.0
  %94 = vmatprep.subr.mxu0 0.0
  %95 = vmatpush1.msra.mxu0 0.0
  %96 = vmatprep.subr.mxu0 0.0
  %97 = vmatpush1.msra.mxu0 0.0
  %98 = vmatprep.subr.mxu0 0.0
  %99 = vmatpush1.msra.mxu0 0.0
  %100 = vmatprep.subr.mxu0 0.0
  %101 = vmatpush1.msra.mxu0 0.0
  %102 = vmatprep.subr.mxu0 0.0
  %103 = vmatpush1.msra.mxu0 0.0
  %104 = vmatprep.subr.mxu0 0.0
  %105 = vmatpush1.msra.mxu0 0.0
  %106 = vmatprep.subr.mxu0 0.0
  %107 = vmatpush1.msra.mxu0 0.0
  %108 = vmatprep.subr.mxu0 0.0
  %109 = vmatpush1.msra.mxu0 0.0
  %110 = vmatprep.subr.mxu0 0.0
  %111 = vmatpush1.msra.mxu0 0.0
  %112 = vmatprep.subr.mxu0 0.0
  %113 = vmatpush1.msra.mxu0 0.0
  %114 = vmatprep.subr.mxu0 0.0
  %115 = vmatpush1.msra.mxu0 0.0
  %116 = vmatprep.subr.mxu0 0.0
  %117 = vmatpush1.msra.mxu0 0.0
  %118 = vmatprep.subr.mxu0 0.0
  %119 = vmatpush1.msra.mxu0 0.0
  %120 = vmatprep.subr.mxu0 0.0
  %121 = vmatpush1.msra.mxu0 0.0
  %122 = vmatprep.subr.mxu0 0.0
  %123 = vmatpush1.msra.mxu0 0.0
  %124 = vmatprep.subr.mxu0 0.0
  %125 = vmatpush1.msra.mxu0 0.0
  %126 = vmatprep.subr.mxu0 0.0
  %127 = vmatpush1.msra.mxu0 0.0
  %128 = vmatprep.subr.mxu0 0.0
  %129 = vmatpush1.msra.mxu0 0.0
  %130 = vmatprep.subr.mxu0 0.0
  %131 = vmatpush1.msra.mxu0 0.0
  %132 = vmatprep.subr.mxu0 0.0
  %133 = vmatpush1.msra.mxu0 0.0
  %134 = vmatprep.subr.mxu0 0.0
  %135 = vmatpush1.msra.mxu0 0.0
  %136 = vmatprep.subr.mxu0 0.0
  %137 = vmatpush1.msra.mxu0 0.0
  %138 = vmatprep.subr.mxu0 0.0
  %139 = vmatpush1.msra.mxu0 0.0
  %140 = vmatprep.subr.mxu0 0.0
  %141 = vmatpush1.msra.mxu0 0.0
  %142 = vmatprep.mubr.f32.mxu0 0.0
  %143 = vmatmul.mubr.f32.gmra.mrb[0].mxu0 %v31
  %v144 = vpop.f32.mrb[0].mxu0
  %v145 = vadd.f32 0.0, %v144
  %v146 = vpop.f32.mrb[0].mxu0
  %147 = vmatprep.mubr.f32.mxu0 0.0
  %148 = vmatmul.mubr.f32.gmra.mrb[0].mxu0 %v34
  %v149 = vpop.f32.mrb[0].mxu0
  %v150 = vadd.f32 0.0, %v149
  %v151 = vpop.f32.mrb[0].mxu0
  %152 = vmatprep.mubr.f32.mxu0 0.0
  %153 = vmatmul.mubr.f32.gmra.mrb[0].mxu0 %v37
  %v154 = vpop.f32.mrb[0].mxu0
  %v155 = vadd.f32 0.0, %v154
  %v156 = vpop.f32.mrb[0].mxu0
  %157 = vmatprep.mubr.f32.mxu0 0.0
  %158 = vmatmul.mubr.f32.gmra.mrb[0].mxu0 %v40
  %v159 = vpop.f32.mrb[0].mxu0
  %v160 = vadd.f32 0.0, %v159
  %v161 = vpop.f32.mrb[0].mxu0
  %162 = vmatprep.mubr.f32.mxu0 0.0
  %163 = vmatmul.mubr.f32.gmra.mrb[0].mxu0 %v43
  %v164 = vpop.f32.mrb[0].mxu0
  %v165 = vadd.f32 0.0, %v164
  %v166 = vpop.f32.mrb[0].mxu0
  %167 = vmatprep.mubr.f32.mxu0 0.0
  %168 = vmatmul.mubr.f32.gmra.mrb[0].mxu0 %v46
  %v169 = vpop.f32.mrb[0].mxu0
  %v170 = vadd.f32 0.0, %v169
  %v171 = vpop.f32.mrb[0].mxu0
  %172 = vmatprep.mubr.f32.mxu0 0.0
  %173 = vmatmul.mubr.f32.gmra.mrb[0].mxu0 %v49
  %v174 = vpop.f32.mrb[0].mxu0
  %v175 = vadd.f32 0.0, %v174
  %v176 = vpop.f32.mrb[0].mxu0
  %177 = vmatprep.mubr.f32.mxu0 0.0
  %178 = vmatmul.mubr.f32.gmra.mrb[0].mxu0 %v52
  %v179 = vpop.f32.mrb[0].mxu0
  %v180 = vadd.f32 0.0, %v179
  %v181 = vpop.f32.mrb[0].mxu0
  %182 = vmatprep.mubr.f32.mxu0 0.0
  %183 = vmatmul.mubr.f32.gmra.mrb[0].mxu0 %v55
  %v184 = vpop.f32.mrb[0].mxu0
  %v185 = vadd.f32 0.0, %v184
  %v186 = vpop.f32.mrb[0].mxu0
  %187 = vmatprep.mubr.f32.mxu0 0.0
  %188 = vmatmul.mubr.f32.gmra.mrb[0].mxu0 %v58
  %v189 = vpop.f32.mrb[0].mxu0
  %v190 = vadd.f32 0.0, %v189
  %v191 = vpop.f32.mrb[0].mxu0
  %192 = vmatprep.mubr.f32.mxu0 0.0
  %193 = vmatmul.mubr.f32.gmra.mrb[0].mxu0 %v61
  %v194 = vpop.f32.mrb[0].mxu0
  %v195 = vadd.f32 0.0, %v194
  %v196 = vpop.f32.mrb[0].mxu0
  %197 = vmatprep.mubr.f32.mxu0 0.0
  %198 = vmatmul.mubr.f32.gmra.mrb[0].mxu0 %v64
  %v199 = vpop.f32.mrb[0].mxu0
  %v200 = vadd.f32 0.0, %v199
  %v201 = vpop.f32.mrb[0].mxu0
  %202 = vmatprep.mubr.f32.mxu0 0.0
  %203 = vmatmul.mubr.f32.gmra.mrb[0].mxu0 %v67
  %v204 = vpop.f32.mrb[0].mxu0
  %v205 = vadd.f32 0.0, %v204
  %v206 = vpop.f32.mrb[0].mxu0
  %207 = vmatprep.mubr.f32.mxu0 0.0
  %208 = vmatmul.mubr.f32.gmra.mrb[0].mxu0 %v70
  %v209 = vpop.f32.mrb[0].mxu0
  %v210 = vadd.f32 0.0, %v209
  %v211 = vpop.f32.mrb[0].mxu0
  %212 = vmatprep.mubr.f32.mxu0 0.0
  %213 = vmatmul.mubr.f32.gmra.mrb[0].mxu0 %v73
  %v214 = vpop.f32.mrb[0].mxu0
  %v215 = vadd.f32 0.0, %v214
  %v216 = vpop.f32.mrb[0].mxu0
  %217 = vmatprep.mubr.f32.mxu0 0.0
  %218 = vmatmul.mubr.f32.gmra.mrb[0].mxu0 %v76
  %v219 = vpop.f32.mrb[0].mxu0
  %v220 = vadd.f32 0.0, %v219
  %v221 = vpop.f32.mrb[0].mxu0
  %222 = vdwg.mxu0
  %vm223 = vcmask 261120
  %224 = vst.msk [vmem:[%s2] sm:$0xff] %vm223, %v145
  %225 = vst.msk [vmem:[%s2 + $0x8] sm:$0xff] %vm223, %v150
  %226 = vst.msk [vmem:[%s2 + $0x10] sm:$0xff] %vm223, %v155
  %227 = vst.msk [vmem:[%s2 + $0x18] sm:$0xff] %vm223, %v160
  %228 = vst.msk [vmem:[%s2 + $0x20] sm:$0xff] %vm223, %v165
  %229 = vst.msk [vmem:[%s2 + $0x28] sm:$0xff] %vm223, %v170
  %230 = vst.msk [vmem:[%s2 + $0x30] sm:$0xff] %vm223, %v175
  %231 = vst.msk [vmem:[%s2 + $0x38] sm:$0xff] %vm223, %v180
  %232 = vst.msk [vmem:[%s2 + $0x40] sm:$0xff] %vm223, %v185
  %233 = vst.msk [vmem:[%s2 + $0x48] sm:$0xff] %vm223, %v190
  %234 = vst.msk [vmem:[%s2 + $0x50] sm:$0xff] %vm223, %v195
  %235 = vst.msk [vmem:[%s2 + $0x58] sm:$0xff] %vm223, %v200
  %236 = vst.msk [vmem:[%s2 + $0x60] sm:$0xff] %vm223, %v205
  %237 = vst.msk [vmem:[%s2 + $0x68] sm:$0xff] %vm223, %v210
  %238 = vst.msk [vmem:[%s2 + $0x70] sm:$0xff] %vm223, %v215
  %239 = vst.msk [vmem:[%s2 + $0x78] sm:$0xff] %vm223, %v220
  // Predicated region
  $region10: #{tpu_custom_call.1} parent=0 // pred_check
    _
  $region11: #{tpu_custom_call.1} parent=0 // pred_check_branch
    %241 = sbr.rel (0) target = $region13
  $region12: #{tpu_custom_call.1} parent=0 // pred_region
    _
  $region13: #{tpu_custom_call.1} parent=0 // pred_fallthru
    _
  // Predicated region
  $region14: #{tpu_custom_call.1} parent=0 // pred_check
    _
  $region15: #{tpu_custom_call.1} parent=0 // pred_check_branch
    %243 = sbr.rel (0) target = $region17
  $region16: #{tpu_custom_call.1} parent=0 // pred_region
    _
  $region17: #{tpu_custom_call.1} parent=0 // pred_fallthru
    _

</llo_original>
